<compile_context>
chip_gen: v7x
topology: tpu7x:2x2x1
jax: 0.10.0
libtpu: 0.0.40
codegen_flags: <defaults>
</compile_context>

<pallas_src>
import functools

import numpy as np
import jax
import jax.numpy as jnp
from jax.experimental import pallas as pl
from jax.experimental.pallas import tpu as pltpu


def _round_up(x, m):
    return (x + m - 1) // m * m


# ----------------------------------------------------------------------------
# Kernel 1: bounding box of the binary mask  (extract_box_from_mask)
# ----------------------------------------------------------------------------
def _bbox_kernel(mask_ref, bbox_ref):
    h, w = mask_ref.shape
    on = mask_ref[...].astype(jnp.int32)                  # 0/1
    row_any = jnp.max(on, axis=1, keepdims=True)          # (H, 1)
    col_any = jnp.max(on, axis=0, keepdims=True)          # (1, W)
    ri = jax.lax.broadcasted_iota(jnp.int32, (h, 1), 0)
    ci = jax.lax.broadcasted_iota(jnp.int32, (1, w), 1)
    bbox_ref[0] = jnp.min(jnp.where(col_any > 0, ci, w))      # x1
    bbox_ref[1] = jnp.max(jnp.where(col_any > 0, ci, -1))     # x2
    bbox_ref[2] = jnp.min(jnp.where(row_any > 0, ri, h))      # y1
    bbox_ref[3] = jnp.max(jnp.where(row_any > 0, ri, -1))     # y2


def extract_bbox_pallas(mask_u8):
    return pl.pallas_call(
        _bbox_kernel,
        out_shape=jax.ShapeDtypeStruct((4,), jnp.int32),
        in_specs=[pl.BlockSpec(memory_space=pltpu.MemorySpace.VMEM)],
        out_specs=pl.BlockSpec(memory_space=pltpu.MemorySpace.SMEM),
    )(mask_u8)


# ----------------------------------------------------------------------------
# Kernel 2: fused crop + square-pad + resize (+ normalize) for the 3 image
#           channels and the mask, as separable weight-matrix matmuls.
# ----------------------------------------------------------------------------
def _u8_to_bf16(x):
    # conservative cast chain (each step is a plain Mosaic conversion);
    # 0..255 is exactly representable in bf16.
    return x.astype(jnp.int32).astype(jnp.float32).astype(jnp.bfloat16)


def _crop_resize_kernel(img_ref, mask_ref, wy_ref, wxT_ref, wyn_ref, wxnT_ref,
                        scale_ref, bias_ref, img_out_ref, mask_out_ref,
                        *, multiply_mask):
    wy = wy_ref[...]                                      # (oh, H)  bf16
    wxT = wxT_ref[...]                                    # (W, ow)  bf16
    mask_bf = _u8_to_bf16(mask_ref[...])                  # (H, W)
    for c in range(3):                                    # static unroll -> one call
        ch = _u8_to_bf16(img_ref[c])                      # (H, W)
        if multiply_mask:                                 # black_background path
            ch = ch * mask_bf
        tmp = jnp.dot(ch, wxT, preferred_element_type=jnp.float32)      # (H, ow)
        res = jnp.dot(wy, tmp.astype(jnp.bfloat16),
                      preferred_element_type=jnp.float32)               # (oh, ow)
        # ToTensor()/255 + T.Normalize folded into: out = res*scale_c - bias_c
        img_out_ref[c] = res * scale_ref[c] - bias_ref[c]
    mtmp = jnp.dot(mask_bf, wxnT_ref[...], preferred_element_type=jnp.float32)
    mask_out_ref[...] = jnp.dot(wyn_ref[...], mtmp.astype(jnp.bfloat16),
                                preferred_element_type=jnp.float32)


def crop_resize_pallas(img_chw_u8, mask_u8, wy, wxT, wyn, wxnT, scale, bias,
                       out_hp, out_wp, multiply_mask):
    kern = functools.partial(_crop_resize_kernel, multiply_mask=multiply_mask)
    vmem = pl.BlockSpec(memory_space=pltpu.MemorySpace.VMEM)
    smem = pl.BlockSpec(memory_space=pltpu.MemorySpace.SMEM)
    return pl.pallas_call(
        kern,
        out_shape=(jax.ShapeDtypeStruct((3, out_hp, out_wp), jnp.float32),
                   jax.ShapeDtypeStruct((out_hp, out_wp), jnp.float32)),
        in_specs=[vmem] * 6 + [smem, smem],
        out_specs=(vmem, vmem),
        compiler_params=pltpu.CompilerParams(vmem_limit_bytes=48 * 1024 * 1024),
    )(img_chw_u8, mask_u8, wy, wxT, wyn, wxnT, scale, bias)


# ----------------------------------------------------------------------------
# On-device (traced) construction of the separable resampling weights.
# Rows: output pixels of the resized padded crop; cols: original image axis.
# Zero-pad regions / padded output rows are zero columns/rows.
# ----------------------------------------------------------------------------
def _cubic_weights(x, A=-0.75):
    ax = jnp.abs(x)
    near = (A + 2.0) * ax ** 3 - (A + 3.0) * ax ** 2 + 1.0
    far = A * ax ** 3 - 5.0 * A * ax ** 2 + 8.0 * A * ax - 4.0 * A
    return jnp.where(ax <= 1.0, near, jnp.where(ax < 2.0, far, 0.0))


def _bicubic_weight_matrix(out_size, out_padded, padded_size, pad_before,
                           crop_start, crop_len, orig_size):
    ps_f = jnp.maximum(padded_size, 1).astype(jnp.float32)
    scale = ps_f / np.float32(out_size)
    i = jnp.arange(out_size, dtype=jnp.float32)
    src = (i + 0.5) * scale - 0.5
    i0 = jnp.floor(src)
    t = src - i0
    k = jnp.arange(-1, 3)
    wgt = _cubic_weights(t[:, None] - k[None, :].astype(jnp.float32))   # (out, 4)
    idx = jnp.clip(i0.astype(jnp.int32)[:, None] + k[None, :], 0, padded_size - 1)
    j = idx - pad_before
    valid = (j >= 0) & (j < crop_len)
    col = jnp.where(valid, crop_start + j, -1)
    wgt = jnp.where(valid, wgt, 0.0)
    cols = jnp.arange(orig_size)
    wm = jnp.sum(jnp.where(col[:, :, None] == cols[None, None, :],
                           wgt[:, :, None], 0.0), axis=1)               # (out, orig)
    return jnp.pad(wm, ((0, out_padded - out_size), (0, 0)))


def _nearest_weight_matrix(out_size, out_padded, padded_size, pad_before,
                           crop_start, crop_len, orig_size):
    ps_f = jnp.maximum(padded_size, 1).astype(jnp.float32)
    scale = ps_f / np.float32(out_size)
    i = jnp.arange(out_size, dtype=jnp.float32)
    idx = jnp.minimum(jnp.floor(i * scale).astype(jnp.int32), padded_size - 1)
    j = idx - pad_before
    valid = (j >= 0) & (j < crop_len)
    col = jnp.where(valid, crop_start + j, -1)
    wm = (col[:, None] == jnp.arange(orig_size)[None, :]).astype(jnp.float32)
    return jnp.pad(wm, ((0, out_padded - out_size), (0, 0)))


# ----------------------------------------------------------------------------
# ImageCropper.forward
# ----------------------------------------------------------------------------
_IMAGENET_MEAN = np.array([0.485, 0.456, 0.406], np.float32)
_IMAGENET_STD = np.array([0.229, 0.224, 0.225], np.float32)


@functools.partial(jax.jit, static_argnums=(3, 4))
def image_cropper_forward(image_hwc_u8, modal_mask, proj_sampling_points,
                          crop_size, black_background=False):
    h_img, w_img, _ = image_hwc_u8.shape
    cs = int(crop_size)
    out_hp = _round_up(cs, 8)        # sublane-aligned rows
    out_wp = _round_up(cs, 128)      # lane-dense columns -> unmasked stores

    # uint8 stays uint8 end-to-end: only a cheap u8 HWC->CHW transpose in XLA.
    img_chw_u8 = jnp.transpose(image_hwc_u8.astype(jnp.uint8), (2, 0, 1))
    mask_u8 = (modal_mask > 0).astype(jnp.uint8)

    bbox = extract_bbox_pallas(mask_u8)                  # traced, stays on device
    x1, x2, y1, y2 = bbox[0], bbox[1], bbox[2], bbox[3]

    if black_background:
        # crop [y1:y2, x1:x2] (exclusive, as in the torch reference), square-pad
        cy1, cx1 = y1, x1
        crop_h = y2 - y1
        crop_w = x2 - x1
        d = crop_h - crop_w
        h_gt_w = d > 0
        pad_left = jnp.where(h_gt_w, d // 2, 0)
        pad_right = jnp.where(h_gt_w, d // 2 + d % 2, 0)
        pad_top = jnp.where(h_gt_w, 0, (-d) // 2)
        pad_bottom = jnp.where(h_gt_w, 0, (-d) // 2 + (-d) % 2)
    else:
        # crop_and_make_square_padding, both branches computed and selected
        h = y2 - y1 + 1
        w = x2 - x1 + 1
        h_gt_w = h > w
        # branch A: h > w  (widen/pad along x)
        d_a = h - w
        pl0 = d_a // 2
        pr0 = pl0 + d_a % 2
        cxa1 = jnp.maximum(0, x1 - pl0)
        cxa2 = jnp.minimum(w_img, x2 + pr0)
        w2 = cxa2 - cxa1 + 1
        d_a2 = h - w2
        pad_left_a = d_a2 // 2
        pad_right_a = pad_left_a + d_a2 % 2
        # branch B: h <= w  (widen/pad along y)
        d_b = w - h
        pt0 = d_b // 2
        pb0 = pt0 + d_b % 2
        cyb1 = jnp.maximum(0, y1 - pt0)
        cyb2 = jnp.minimum(h_img, y2 + pb0)
        h2 = cyb2 - cyb1 + 1
        d_b2 = w - h2
        pad_top_b = d_b2 // 2
        pad_bottom_b = pad_top_b + d_b2 % 2
        cy1 = jnp.where(h_gt_w, y1, cyb1)
        cy2e = jnp.where(h_gt_w, y2, cyb2)
        cx1 = jnp.where(h_gt_w, cxa1, x1)
        cx2e = jnp.where(h_gt_w, cxa2, x2)
        pad_left = jnp.where(h_gt_w, pad_left_a, 0)
        pad_right = jnp.where(h_gt_w, pad_right_a, 0)
        pad_top = jnp.where(h_gt_w, 0, pad_top_b)
        pad_bottom = jnp.where(h_gt_w, 0, pad_bottom_b)
        crop_h = cy2e - cy1                              # exclusive slicing [cy1:cy2)
        crop_w = cx2e - cx1

    ph = crop_h + pad_top + pad_bottom                   # square padding -> ph == pw
    pw = crop_w + pad_left + pad_right
    x1_new = x1 + pad_left
    y1_new = y1 + pad_top

    # separable resampling weights, built on device from the traced bbox
    wy = _bicubic_weight_matrix(cs, out_hp, ph, pad_top, cy1, crop_h, h_img)
    wx = _bicubic_weight_matrix(cs, out_wp, pw, pad_left, cx1, crop_w, w_img)
    wyn = _nearest_weight_matrix(cs, out_hp, ph, pad_top, cy1, crop_h, h_img)
    wxn = _nearest_weight_matrix(cs, out_wp, pw, pad_left, cx1, crop_w, w_img)

    wy_bf = wy.astype(jnp.bfloat16)
    wxT_bf = wx.T.astype(jnp.bfloat16)
    wyn_bf = wyn.astype(jnp.bfloat16)
    wxnT_bf = wxn.T.astype(jnp.bfloat16)

    # fold ToTensor()/255 and T.Normalize: out = res * scale_c - bias_c
    scale = jnp.asarray(1.0 / (255.0 * _IMAGENET_STD), jnp.float32)
    bias = jnp.asarray(_IMAGENET_MEAN / _IMAGENET_STD, jnp.float32)

    img_out_p, mask_out_p = crop_resize_pallas(
        img_chw_u8, mask_u8, wy_bf, wxT_bf, wyn_bf, wxnT_bf, scale, bias,
        out_hp, out_wp, multiply_mask=black_background)

    image_out = img_out_p[:, :cs, :cs]                   # drop lane/sublane padding
    mask_out = mask_out_p[:cs, :cs]

    # projection-point adjustment: tiny (N, 2) elementwise -> plain XLA
    resize_factor = jnp.float32(cs) / jnp.maximum(ph, 1).astype(jnp.float32)
    offset = jnp.stack([x1_new, y1_new]).astype(jnp.float32)
    points_out = (proj_sampling_points.astype(jnp.float32)
                  - offset[None, :]) * resize_factor

    return image_out, mask_out, points_out


# ----------------------------------------------------------------------------
if __name__ == "__main__":
    key = jax.random.PRNGKey(0)
    k_img, k_pts = jax.random.split(key)

    H, W, N = 32, 32, 8
    crop_size = 28

    image_u8 = jax.random.randint(k_img, (H, W, 3), 0, 256, jnp.int32).astype(jnp.uint8)
    modal_mask = jnp.zeros((H, W), jnp.float32).at[6:22, 10:26].set(1.0)
    proj_points = jax.random.uniform(k_pts, (N, 2), jnp.float32) * jnp.float32(W)

    image_out, mask_out, points_out = image_cropper_forward(
        image_u8, modal_mask, proj_points, crop_size, False)
    jax.block_until_ready((image_out, mask_out, points_out))
    assert image_out.shape == (3, crop_size, crop_size)
    assert mask_out.shape == (crop_size, crop_size)
    assert points_out.shape == (N, 2)

    # black_background path (separate static specialization of the same kernel)
    image_out_b, mask_out_b, _ = image_cropper_forward(
        image_u8, modal_mask, proj_points, crop_size, True)
    jax.block_until_ready((image_out_b, mask_out_b))
    assert image_out_b.shape == (3, crop_size, crop_size)

    print("KERNEL_OK")
</pallas_src>

<mosaic_0001>
module attributes {stable_mosaic.version = 11 : i64} {
  func.func @_bbox_kernel(%arg0: memref<32x32xi8, #tpu.memory_space<vmem>>, %arg1: memref<4xi32, #tpu.memory_space<smem>>) attributes {dimension_semantics = [], scalar_prefetch = 0 : i64, scratch_operands = 0 : i64, tpu.core_type = #tpu.core_type<tc>} {
    %c0 = arith.constant 0 : index
    %c0_0 = arith.constant 0 : index
    %0 = vector.load %arg0[%c0, %c0_0] : memref<32x32xi8, #tpu.memory_space<vmem>>, vector<32x32xi8>
    %1 = arith.extui %0 : vector<32x32xi8> to vector<32x32xi32>
    %cst = arith.constant dense<-2147483648> : vector<32xi32>
    %2 = vector.multi_reduction <maxsi>, %1, %cst [1] : vector<32x32xi32> to vector<32xi32>
    %3 = vector.shape_cast %2 : vector<32xi32> to vector<32x1xi32>
    %cst_1 = arith.constant dense<-2147483648> : vector<32xi32>
    %4 = vector.multi_reduction <maxsi>, %1, %cst_1 [0] : vector<32x32xi32> to vector<32xi32>
    %5 = vector.shape_cast %4 : vector<32xi32> to vector<1x32xi32>
    %6 = tpu.iota {dimensions = array<i32: 0>} : vector<32x1xi32>
    %7 = tpu.iota {dimensions = array<i32: 1>} : vector<1x32xi32>
    %c0_i32 = arith.constant 0 : i32
    %8 = vector.broadcast %c0_i32 : i32 to vector<1x32xi32>
    %9 = arith.cmpi sgt, %5, %8 : vector<1x32xi32>
    %c32_i32 = arith.constant 32 : i32
    %10 = vector.broadcast %c32_i32 : i32 to vector<1x32xi32>
    %11 = arith.select %9, %7, %10 : vector<1x32xi1>, vector<1x32xi32>
    %12 = vector.shape_cast %11 : vector<1x32xi32> to vector<1x1x32xi32>
    %cst_2 = arith.constant dense<2147483647> : vector<1xi32>
    %13 = vector.multi_reduction <minsi>, %12, %cst_2 [1, 2] : vector<1x1x32xi32> to vector<1xi32>
    %14 = vector.shape_cast %13 : vector<1xi32> to vector<1x1x1xi32>
    %15 = vector.extract %14[0, 0, 0] : i32 from vector<1x1x1xi32>
    %c0_3 = arith.constant 0 : index
    %16 = memref.load %arg1[%c0_3] : memref<4xi32, #tpu.memory_space<smem>>
    memref.store %15, %arg1[%c0_3] : memref<4xi32, #tpu.memory_space<smem>>
    %c0_i32_4 = arith.constant 0 : i32
    %17 = vector.broadcast %c0_i32_4 : i32 to vector<1x32xi32>
    %18 = arith.cmpi sgt, %5, %17 : vector<1x32xi32>
    %c-1_i32 = arith.constant -1 : i32
    %19 = vector.broadcast %c-1_i32 : i32 to vector<1x32xi32>
    %20 = arith.select %18, %7, %19 : vector<1x32xi1>, vector<1x32xi32>
    %21 = vector.shape_cast %20 : vector<1x32xi32> to vector<1x1x32xi32>
    %cst_5 = arith.constant dense<-2147483648> : vector<1xi32>
    %22 = vector.multi_reduction <maxsi>, %21, %cst_5 [1, 2] : vector<1x1x32xi32> to vector<1xi32>
    %23 = vector.shape_cast %22 : vector<1xi32> to vector<1x1x1xi32>
    %24 = vector.extract %23[0, 0, 0] : i32 from vector<1x1x1xi32>
    %c1 = arith.constant 1 : index
    %25 = memref.load %arg1[%c1] : memref<4xi32, #tpu.memory_space<smem>>
    memref.store %24, %arg1[%c1] : memref<4xi32, #tpu.memory_space<smem>>
    %c0_i32_6 = arith.constant 0 : i32
    %26 = vector.broadcast %c0_i32_6 : i32 to vector<32x1xi32>
    %27 = arith.cmpi sgt, %3, %26 : vector<32x1xi32>
    %c32_i32_7 = arith.constant 32 : i32
    %28 = vector.broadcast %c32_i32_7 : i32 to vector<32x1xi32>
    %29 = arith.select %27, %6, %28 : vector<32x1xi1>, vector<32x1xi32>
    %30 = vector.shape_cast %29 : vector<32x1xi32> to vector<1x32x1xi32>
    %cst_8 = arith.constant dense<2147483647> : vector<1xi32>
    %31 = vector.multi_reduction <minsi>, %30, %cst_8 [1, 2] : vector<1x32x1xi32> to vector<1xi32>
    %32 = vector.shape_cast %31 : vector<1xi32> to vector<1x1x1xi32>
    %33 = vector.extract %32[0, 0, 0] : i32 from vector<1x1x1xi32>
    %c2 = arith.constant 2 : index
    %34 = memref.load %arg1[%c2] : memref<4xi32, #tpu.memory_space<smem>>
    memref.store %33, %arg1[%c2] : memref<4xi32, #tpu.memory_space<smem>>
    %c0_i32_9 = arith.constant 0 : i32
    %35 = vector.broadcast %c0_i32_9 : i32 to vector<32x1xi32>
    %36 = arith.cmpi sgt, %3, %35 : vector<32x1xi32>
    %c-1_i32_10 = arith.constant -1 : i32
    %37 = vector.broadcast %c-1_i32_10 : i32 to vector<32x1xi32>
    %38 = arith.select %36, %6, %37 : vector<32x1xi1>, vector<32x1xi32>
    %39 = vector.shape_cast %38 : vector<32x1xi32> to vector<1x32x1xi32>
    %cst_11 = arith.constant dense<-2147483648> : vector<1xi32>
    %40 = vector.multi_reduction <maxsi>, %39, %cst_11 [1, 2] : vector<1x32x1xi32> to vector<1xi32>
    %41 = vector.shape_cast %40 : vector<1xi32> to vector<1x1x1xi32>
    %42 = vector.extract %41[0, 0, 0] : i32 from vector<1x1x1xi32>
    %c3 = arith.constant 3 : index
    %43 = memref.load %arg1[%c3] : memref<4xi32, #tpu.memory_space<smem>>
    memref.store %42, %arg1[%c3] : memref<4xi32, #tpu.memory_space<smem>>
    return
  }
}

module attributes {stable_mosaic.version = 11 : i64} {
  func.func @_crop_resize_kernel(%arg0: memref<3x32x32xi8, #tpu.memory_space<vmem>>, %arg1: memref<32x32xi8, #tpu.memory_space<vmem>>, %arg2: memref<32x32xbf16, #tpu.memory_space<vmem>>, %arg3: memref<32x128xbf16, #tpu.memory_space<vmem>>, %arg4: memref<32x32xbf16, #tpu.memory_space<vmem>>, %arg5: memref<32x128xbf16, #tpu.memory_space<vmem>>, %arg6: memref<3xf32, #tpu.memory_space<smem>>, %arg7: memref<3xf32, #tpu.memory_space<smem>>, %arg8: memref<3x32x128xf32, #tpu.memory_space<vmem>>, %arg9: memref<32x128xf32, #tpu.memory_space<vmem>>) attributes {dimension_semantics = [], scalar_prefetch = 0 : i64, scratch_operands = 0 : i64, tpu.core_type = #tpu.core_type<tc>} {
    %c0 = arith.constant 0 : index
    %c0_0 = arith.constant 0 : index
    %0 = vector.load %arg2[%c0, %c0_0] : memref<32x32xbf16, #tpu.memory_space<vmem>>, vector<32x32xbf16>
    %c0_1 = arith.constant 0 : index
    %c0_2 = arith.constant 0 : index
    %1 = vector.load %arg3[%c0_1, %c0_2] : memref<32x128xbf16, #tpu.memory_space<vmem>>, vector<32x128xbf16>
    %c0_3 = arith.constant 0 : index
    %c0_4 = arith.constant 0 : index
    %2 = vector.load %arg1[%c0_3, %c0_4] : memref<32x32xi8, #tpu.memory_space<vmem>>, vector<32x32xi8>
    %3 = arith.extui %2 : vector<32x32xi8> to vector<32x32xi32>
    %4 = arith.sitofp %3 : vector<32x32xi32> to vector<32x32xf32>
    %5 = arith.truncf %4 : vector<32x32xf32> to vector<32x32xbf16>
    %c0_5 = arith.constant 0 : index
    %c0_6 = arith.constant 0 : index
    %c0_7 = arith.constant 0 : index
    %6 = vector.load %arg0[%c0_5, %c0_6, %c0_7] : memref<3x32x32xi8, #tpu.memory_space<vmem>>, vector<1x32x32xi8>
    %7 = vector.shape_cast %6 : vector<1x32x32xi8> to vector<32x32xi8>
    %8 = arith.extui %7 : vector<32x32xi8> to vector<32x32xi32>
    %9 = arith.sitofp %8 : vector<32x32xi32> to vector<32x32xf32>
    %10 = arith.truncf %9 : vector<32x32xf32> to vector<32x32xbf16>
    %cst = arith.constant dense<0.000000e+00> : vector<32x128xf32>
    %11 = tpu.matmul %10, %1, %cst {dimension_numbers = #tpu.dot_dimension_numbers<[1], [0], [0], [1], [0, 0, 1, 1], [], []>} : vector<32x32xbf16>, vector<32x128xbf16>, vector<32x128xf32> -> vector<32x128xf32>
    %12 = arith.truncf %11 : vector<32x128xf32> to vector<32x128xbf16>
    %cst_8 = arith.constant dense<0.000000e+00> : vector<32x128xf32>
    %13 = tpu.matmul %0, %12, %cst_8 {dimension_numbers = #tpu.dot_dimension_numbers<[1], [0], [0], [1], [0, 0, 1, 1], [], []>} : vector<32x32xbf16>, vector<32x128xbf16>, vector<32x128xf32> -> vector<32x128xf32>
    %c0_9 = arith.constant 0 : index
    %14 = memref.load %arg6[%c0_9] : memref<3xf32, #tpu.memory_space<smem>>
    %15 = vector.broadcast %14 : f32 to vector<32x128xf32>
    %16 = arith.mulf %13, %15 : vector<32x128xf32>
    %c0_10 = arith.constant 0 : index
    %17 = memref.load %arg7[%c0_10] : memref<3xf32, #tpu.memory_space<smem>>
    %18 = vector.broadcast %17 : f32 to vector<32x128xf32>
    %19 = arith.subf %16, %18 : vector<32x128xf32>
    %c0_11 = arith.constant 0 : index
    %c0_12 = arith.constant 0 : index
    %c0_13 = arith.constant 0 : index
    %20 = vector.load %arg8[%c0_11, %c0_12, %c0_13] : memref<3x32x128xf32, #tpu.memory_space<vmem>>, vector<1x32x128xf32>
    %21 = vector.shape_cast %20 : vector<1x32x128xf32> to vector<32x128xf32>
    %22 = vector.shape_cast %19 : vector<32x128xf32> to vector<1x32x128xf32>
    tpu.vector_store %arg8[%c0_11, %c0_12, %c0_13], %22 {strides = array<i32>} : memref<3x32x128xf32, #tpu.memory_space<vmem>>, vector<1x32x128xf32>,
    %c1 = arith.constant 1 : index
    %c0_14 = arith.constant 0 : index
    %c0_15 = arith.constant 0 : index
    %23 = vector.load %arg0[%c1, %c0_14, %c0_15] : memref<3x32x32xi8, #tpu.memory_space<vmem>>, vector<1x32x32xi8>
    %24 = vector.shape_cast %23 : vector<1x32x32xi8> to vector<32x32xi8>
    %25 = arith.extui %24 : vector<32x32xi8> to vector<32x32xi32>
    %26 = arith.sitofp %25 : vector<32x32xi32> to vector<32x32xf32>
    %27 = arith.truncf %26 : vector<32x32xf32> to vector<32x32xbf16>
    %cst_16 = arith.constant dense<0.000000e+00> : vector<32x128xf32>
    %28 = tpu.matmul %27, %1, %cst_16 {dimension_numbers = #tpu.dot_dimension_numbers<[1], [0], [0], [1], [0, 0, 1, 1], [], []>} : vector<32x32xbf16>, vector<32x128xbf16>, vector<32x128xf32> -> vector<32x128xf32>
    %29 = arith.truncf %28 : vector<32x128xf32> to vector<32x128xbf16>
    %cst_17 = arith.constant dense<0.000000e+00> : vector<32x128xf32>
    %30 = tpu.matmul %0, %29, %cst_17 {dimension_numbers = #tpu.dot_dimension_numbers<[1], [0], [0], [1], [0, 0, 1, 1], [], []>} : vector<32x32xbf16>, vector<32x128xbf16>, vector<32x128xf32> -> vector<32x128xf32>
    %c1_18 = arith.constant 1 : index
    %31 = memref.load %arg6[%c1_18] : memref<3xf32, #tpu.memory_space<smem>>
    %32 = vector.broadcast %31 : f32 to vector<32x128xf32>
    %33 = arith.mulf %30, %32 : vector<32x128xf32>
    %c1_19 = arith.constant 1 : index
    %34 = memref.load %arg7[%c1_19] : memref<3xf32, #tpu.memory_space<smem>>
    %35 = vector.broadcast %34 : f32 to vector<32x128xf32>
    %36 = arith.subf %33, %35 : vector<32x128xf32>
    %c1_20 = arith.constant 1 : index
    %c0_21 = arith.constant 0 : index
    %c0_22 = arith.constant 0 : index
    %37 = vector.load %arg8[%c1_20, %c0_21, %c0_22] : memref<3x32x128xf32, #tpu.memory_space<vmem>>, vector<1x32x128xf32>
    %38 = vector.shape_cast %37 : vector<1x32x128xf32> to vector<32x128xf32>
    %39 = vector.shape_cast %36 : vector<32x128xf32> to vector<1x32x128xf32>
    tpu.vector_store %arg8[%c1_20, %c0_21, %c0_22], %39 {strides = array<i32>} : memref<3x32x128xf32, #tpu.memory_space<vmem>>, vector<1x32x128xf32>,
    %c2 = arith.constant 2 : index
    %c0_23 = arith.constant 0 : index
    %c0_24 = arith.constant 0 : index
    %40 = vector.load %arg0[%c2, %c0_23, %c0_24] : memref<3x32x32xi8, #tpu.memory_space<vmem>>, vector<1x32x32xi8>
    %41 = vector.shape_cast %40 : vector<1x32x32xi8> to vector<32x32xi8>
    %42 = arith.extui %41 : vector<32x32xi8> to vector<32x32xi32>
    %43 = arith.sitofp %42 : vector<32x32xi32> to vector<32x32xf32>
    %44 = arith.truncf %43 : vector<32x32xf32> to vector<32x32xbf16>
    %cst_25 = arith.constant dense<0.000000e+00> : vector<32x128xf32>
    %45 = tpu.matmul %44, %1, %cst_25 {dimension_numbers = #tpu.dot_dimension_numbers<[1], [0], [0], [1], [0, 0, 1, 1], [], []>} : vector<32x32xbf16>, vector<32x128xbf16>, vector<32x128xf32> -> vector<32x128xf32>
    %46 = arith.truncf %45 : vector<32x128xf32> to vector<32x128xbf16>
    %cst_26 = arith.constant dense<0.000000e+00> : vector<32x128xf32>
    %47 = tpu.matmul %0, %46, %cst_26 {dimension_numbers = #tpu.dot_dimension_numbers<[1], [0], [0], [1], [0, 0, 1, 1], [], []>} : vector<32x32xbf16>, vector<32x128xbf16>, vector<32x128xf32> -> vector<32x128xf32>
    %c2_27 = arith.constant 2 : index
    %48 = memref.load %arg6[%c2_27] : memref<3xf32, #tpu.memory_space<smem>>
    %49 = vector.broadcast %48 : f32 to vector<32x128xf32>
    %50 = arith.mulf %47, %49 : vector<32x128xf32>
    %c2_28 = arith.constant 2 : index
    %51 = memref.load %arg7[%c2_28] : memref<3xf32, #tpu.memory_space<smem>>
    %52 = vector.broadcast %51 : f32 to vector<32x128xf32>
    %53 = arith.subf %50, %52 : vector<32x128xf32>
    %c2_29 = arith.constant 2 : index
    %c0_30 = arith.constant 0 : index
    %c0_31 = arith.constant 0 : index
    %54 = vector.load %arg8[%c2_29, %c0_30, %c0_31] : memref<3x32x128xf32, #tpu.memory_space<vmem>>, vector<1x32x128xf32>
    %55 = vector.shape_cast %54 : vector<1x32x128xf32> to vector<32x128xf32>
    %56 = vector.shape_cast %53 : vector<32x128xf32> to vector<1x32x128xf32>
    tpu.vector_store %arg8[%c2_29, %c0_30, %c0_31], %56 {strides = array<i32>} : memref<3x32x128xf32, #tpu.memory_space<vmem>>, vector<1x32x128xf32>,
    %c0_32 = arith.constant 0 : index
    %c0_33 = arith.constant 0 : index
    %57 = vector.load %arg5[%c0_32, %c0_33] : memref<32x128xbf16, #tpu.memory_space<vmem>>, vector<32x128xbf16>
    %cst_34 = arith.constant dense<0.000000e+00> : vector<32x128xf32>
    %58 = tpu.matmul %5, %57, %cst_34 {dimension_numbers = #tpu.dot_dimension_numbers<[1], [0], [0], [1], [0, 0, 1, 1], [], []>} : vector<32x32xbf16>, vector<32x128xbf16>, vector<32x128xf32> -> vector<32x128xf32>
    %c0_35 = arith.constant 0 : index
    %c0_36 = arith.constant 0 : index
    %59 = vector.load %arg4[%c0_35, %c0_36] : memref<32x32xbf16, #tpu.memory_space<vmem>>, vector<32x32xbf16>
    %60 = arith.truncf %58 : vector<32x128xf32> to vector<32x128xbf16>
    %cst_37 = arith.constant dense<0.000000e+00> : vector<32x128xf32>
    %61 = tpu.matmul %59, %60, %cst_37 {dimension_numbers = #tpu.dot_dimension_numbers<[1], [0], [0], [1], [0, 0, 1, 1], [], []>} : vector<32x32xbf16>, vector<32x128xbf16>, vector<32x128xf32> -> vector<32x128xf32>
    %c0_38 = arith.constant 0 : index
    %c0_39 = arith.constant 0 : index
    %62 = vector.load %arg9[%c0_38, %c0_39] : memref<32x128xf32, #tpu.memory_space<vmem>>, vector<32x128xf32>
    tpu.vector_store %arg9[%c0_38, %c0_39], %61 {strides = array<i32>} : memref<32x128xf32, #tpu.memory_space<vmem>>, vector<32x128xf32>,
    return
  }
}

</mosaic_0001>

<llo_original>
// kernel: image_cropper_forward.2
$region0: #{image_cropper_forward.2}
  #allocation0 [shape = 'u32[]', space=smem, size = 0x4, offset = 0x4, fixed_abs, tag = 'smem constant byte address 0x4 - core index']
  #allocation1 [shape = 'u32[144,128]{1,0:T(1,128)}', space=vmem, size = 0x12000, scoped, tag = 'internal scratch']
  %s0 = inlined_call_operand.vmem [shape: u8[32,32], index: 0, kind: input, shape index: {}]
  %s1 = inlined_call_operand.vmem [shape: s32[4], index: 1, kind: output, shape index: {}]
  %s2 = sld [smem:[#allocation0]]
  $region14: #{image_cropper_forward.2} parent=0
    _
  %s4 = ssub.s32 1, %s2
  %s5 = scalar_select 0, %s4, %s2
  $region1: #{image_cropper_forward.2} parent=0
    #allocation2 [shape = 'u8[512]{0}', space=smem, size = 0x200, scoped, tag = 'output window, operand 0, single buffered']
    #allocation3 [shape = 's32[1]{0}', space=sflag, size = 0x4, scoped, tag = 'scoped memory for image_cropper_forward.2']
    %6 = vsyncpa [#allocation3], 0
    // Predicated region
    $region2: #{image_cropper_forward.2} parent=1 // pred_check
      _
    $region3: #{image_cropper_forward.2} parent=1 // pred_check_branch
      %8 = sbr.rel (0) target = $region5
    $region4: #{image_cropper_forward.2} parent=1 // pred_region
      _
    $region5: #{image_cropper_forward.2} parent=1 // pred_fallthru
      _
    %v9 = vld [vmem:[%s0] sm:$0xff]
    %v10 = vunpack.c.0.s8 %v9
    %v11 = vunpack.c.1.s8 %v9
    %v12 = vunpack.c.2.s8 %v9
    %v13 = vunpack.c.3.s8 %v9
    %v14 = vand.u32 %v10, 255
    %v15 = vand.u32 %v11, 255
    %v16 = vand.u32 %v12, 255
    %v17 = vand.u32 %v13, 255
    %vm18 = vcmask 261120
    %v19 = vsel %vm18, %v14, 2147483648
    %v20 = vand.u32 %v19, 65535
    %v21 = vshra.s32 %v19, 16
    %v22 = vcvt.s32.f32 %v20
    %v23 = vcvt.s32.f32 %v21
    %24 = vmax.xlane.f32.xlu0 %v23
    %v25 = vpop.xlane.xlu0 %24
    %vm26 = vcmp.eq.f32.partialorder %v23, %v25
    %v27 = vsel %vm26, %v22, -inf
    %28 = vmax.xlane.f32.xlu0 %v27
    %v29 = vpop.xlane.xlu0 %28
    %v30 = vcvt.f32.s32 %v29
    %v31 = vcvt.f32.s32 %v25
    %v32 = vshll.u32 %v31, 16
    %v33 = vadd.s32 %v32, %v30
    %v34 = vsel %vm18, %v15, 2147483648
    %v35 = vand.u32 %v34, 65535
    %v36 = vshra.s32 %v34, 16
    %v37 = vcvt.s32.f32 %v35
    %v38 = vcvt.s32.f32 %v36
    %39 = vmax.xlane.f32.xlu0 %v38
    %v40 = vpop.xlane.xlu0 %39
    %vm41 = vcmp.eq.f32.partialorder %v38, %v40
    %v42 = vsel %vm41, %v37, -inf
    %43 = vmax.xlane.f32.xlu0 %v42
    %v44 = vpop.xlane.xlu0 %43
    %v45 = vcvt.f32.s32 %v44
    %v46 = vcvt.f32.s32 %v40
    %v47 = vshll.u32 %v46, 16
    %v48 = vadd.s32 %v47, %v45
    %v49 = vsel %vm18, %v16, 2147483648
    %v50 = vand.u32 %v49, 65535
    %v51 = vshra.s32 %v49, 16
    %v52 = vcvt.s32.f32 %v50
    %v53 = vcvt.s32.f32 %v51
    %54 = vmax.xlane.f32.xlu0 %v53
    %v55 = vpop.xlane.xlu0 %54
    %vm56 = vcmp.eq.f32.partialorder %v53, %v55
    %v57 = vsel %vm56, %v52, -inf
    %58 = vmax.xlane.f32.xlu0 %v57
    %v59 = vpop.xlane.xlu0 %58
    %v60 = vcvt.f32.s32 %v59
    %v61 = vcvt.f32.s32 %v55
    %v62 = vshll.u32 %v61, 16
    %v63 = vadd.s32 %v62, %v60
    %v64 = vsel %vm18, %v17, 2147483648
    %v65 = vand.u32 %v64, 65535
    %v66 = vshra.s32 %v64, 16
    %v67 = vcvt.s32.f32 %v65
    %v68 = vcvt.s32.f32 %v66
    %69 = vmax.xlane.f32.xlu0 %v68
    %v70 = vpop.xlane.xlu0 %69
    %vm71 = vcmp.eq.f32.partialorder %v68, %v70
    %v72 = vsel %vm71, %v67, -inf
    %73 = vmax.xlane.f32.xlu0 %v72
    %v74 = vpop.xlane.xlu0 %73
    %v75 = vcvt.f32.s32 %v74
    %v76 = vcvt.f32.s32 %v70
    %v77 = vshll.u32 %v76, 16
    %v78 = vadd.s32 %v77, %v75
    %vm79 = vcmp.gt.s32.totalorder %v19, %v34
    %v80 = vsel %vm79, %v19, %v34
    %vm81 = vcmp.gt.s32.totalorder %v49, %v64
    %v82 = vsel %vm81, %v49, %v64
    %vm83 = vcmp.gt.s32.totalorder %v80, %v82
    %v84 = vsel %vm83, %v80, %v82
    %v85 = vrot.slane %v84, 4
    %vm86 = vcmp.gt.s32.totalorder %v84, %v85
    %v87 = vsel %vm86, %v84, %v85
    %v88 = vrot.slane %v87, 2
    %vm89 = vcmp.gt.s32.totalorder %v87, %v88
    %v90 = vsel %vm89, %v87, %v88
    %v91 = vrot.slane %v90, 1
    %vm92 = vcmp.gt.s32.totalorder %v90, %v91
    %v93 = vsel %vm92, %v90, %v91
    %v94 = vlaneseq
    %v95 = vshrl.u32 %v94, 7
    %v96 = vadd.s32 %v95, 8
    %v97 = vadd.s32 %v95, 16
    %v98 = vadd.s32 %v95, 24
    %v99 = vlaneseq
    %v100 = vand.u32 %v99, 127
    %vm101 = vcmp.gt.s32.totalorder %v93, 0
    %v102 = vsel %vm101, %v100, 32
    %v103 = vsel %vm18, %v102, 2147483647
    %v104 = vand.u32 %v103, 65535
    %v105 = vshra.s32 %v103, 16
    %v106 = vcvt.s32.f32 %v104
    %v107 = vcvt.s32.f32 %v105
    %108 = vmin.xlane.f32.xlu0 %v107
    %v109 = vpop.xlane.xlu0 %108
    %vm110 = vcmp.eq.f32.partialorder %v107, %v109
    %v111 = vsel %vm110, %v106, inf
    %112 = vmin.xlane.f32.xlu0 %v111
    %v113 = vpop.xlane.xlu0 %112
    %v114 = vcvt.f32.s32 %v113
    %v115 = vcvt.f32.s32 %v109
    %v116 = vshll.u32 %v115, 16
    %v117 = vadd.s32 %v116, %v114
    %s118 = vtos %v117
    %s119 = scalar_lea.smem [#allocation2], 0
    %120 = sst [smem:[%s119]] %s118
    %v121 = vsel %vm101, %v100, 4294967295
    %v122 = vsel %vm18, %v121, 2147483648
    %v123 = vand.u32 %v122, 65535
    %v124 = vshra.s32 %v122, 16
    %v125 = vcvt.s32.f32 %v123
    %v126 = vcvt.s32.f32 %v124
    %127 = vmax.xlane.f32.xlu0 %v126
    %v128 = vpop.xlane.xlu0 %127
    %vm129 = vcmp.eq.f32.partialorder %v126, %v128
    %v130 = vsel %vm129, %v125, -inf
    %131 = vmax.xlane.f32.xlu0 %v130
    %v132 = vpop.xlane.xlu0 %131
    %v133 = vcvt.f32.s32 %v132
    %v134 = vcvt.f32.s32 %v128
    %v135 = vshll.u32 %v134, 16
    %v136 = vadd.s32 %v135, %v133
    %s137 = vtos %v136
    %s138 = scalar_lea.smem [#allocation2], 1
    %139 = sst [smem:[%s138]] %s137
    %vm140 = vcmp.gt.s32.totalorder %v33, 0
    %vm141 = vcmp.gt.s32.totalorder %v48, 0
    %vm142 = vcmp.gt.s32.totalorder %v63, 0
    %vm143 = vcmp.gt.s32.totalorder %v78, 0
    %v144 = vsel %vm140, %v95, 32
    %v145 = vsel %vm141, %v96, 32
    %v146 = vsel %vm142, %v97, 32
    %v147 = vsel %vm143, %v98, 32
    %vm148 = vcmp.lt.s32.totalorder %v144, %v145
    %v149 = vsel %vm148, %v144, %v145
    %vm150 = vcmp.lt.s32.totalorder %v146, %v147
    %v151 = vsel %vm150, %v146, %v147
    %vm152 = vcmp.lt.s32.totalorder %v149, %v151
    %v153 = vsel %vm152, %v149, %v151
    %v154 = vrot.slane %v153, 4
    %vm155 = vcmp.lt.s32.totalorder %v153, %v154
    %v156 = vsel %vm155, %v153, %v154
    %v157 = vrot.slane %v156, 2
    %vm158 = vcmp.lt.s32.totalorder %v156, %v157
    %v159 = vsel %vm158, %v156, %v157
    %v160 = vrot.slane %v159, 1
    %vm161 = vcmp.lt.s32.totalorder %v159, %v160
    %v162 = vsel %vm161, %v159, %v160
    %s163 = vtos %v162
    %s164 = scalar_lea.smem [#allocation2], 2
    %165 = sst [smem:[%s164]] %s163
    %v166 = vsel %vm140, %v95, 4294967295
    %v167 = vsel %vm141, %v96, 4294967295
    %v168 = vsel %vm142, %v97, 4294967295
    %v169 = vsel %vm143, %v98, 4294967295
    %vm170 = vcmp.gt.s32.totalorder %v166, %v167
    %v171 = vsel %vm170, %v166, %v167
    %vm172 = vcmp.gt.s32.totalorder %v168, %v169
    %v173 = vsel %vm172, %v168, %v169
    %vm174 = vcmp.gt.s32.totalorder %v171, %v173
    %v175 = vsel %vm174, %v171, %v173
    %v176 = vrot.slane %v175, 4
    %vm177 = vcmp.gt.s32.totalorder %v175, %v176
    %v178 = vsel %vm177, %v175, %v176
    %v179 = vrot.slane %v178, 2
    %vm180 = vcmp.gt.s32.totalorder %v178, %v179
    %v181 = vsel %vm180, %v178, %v179
    %v182 = vrot.slane %v181, 1
    %vm183 = vcmp.gt.s32.totalorder %v181, %v182
    %v184 = vsel %vm183, %v181, %v182
    %s185 = vtos %v184
    %s186 = scalar_lea.smem [#allocation2], 3
    %187 = sst [smem:[%s186]] %s185
    // Predicated region
    $region6: #{image_cropper_forward.2} parent=1 // pred_check
      _
    $region7: #{image_cropper_forward.2} parent=1 // pred_check_branch
      %189 = sbr.rel (0) target = $region9
    $region8: #{image_cropper_forward.2} parent=1 // pred_region
      %s191 = ssub.s32 16, 16
      %192 = vsyncadd [#allocation3], %s191
      %s194 = sshll.u32 %s1, 4
      %s195 = int_to_ptr.vmem [resolvable:$true] %s194
      %197 = dma.smem_to_vmem [#allocation2], 16, %s195, [#allocation3]
    $region9: #{image_cropper_forward.2} parent=1 // pred_fallthru
      _
    // Predicated region
    $region10: #{image_cropper_forward.2} parent=1 // pred_check
      _
    $region11: #{image_cropper_forward.2} parent=1 // pred_check_branch
      %199 = sbr.rel (0) target = $region13
    $region12: #{image_cropper_forward.2} parent=1 // pred_region
      %200 = dma.done [#allocation3], 16
    $region13: #{image_cropper_forward.2} parent=1 // pred_fallthru
      _
    %201 = sfence
    %202 = vsyncpa [#allocation3], 1

// kernel: image_cropper_forward.3
$region0: #{image_cropper_forward.3}
  #allocation0 [shape = 'u32[]', space=smem, size = 0x4, offset = 0x4, fixed_abs, tag = 'smem constant byte address 0x4 - core index']
  #allocation1 [shape = 'u32[144,128]{1,0:T(1,128)}', space=vmem, size = 0x12000, scoped, tag = 'internal scratch']
  %s0 = inlined_call_operand.vmem [shape: u8[3,32,32], index: 0, kind: input, shape index: {}]
  %s1 = inlined_call_operand.vmem [shape: u8[32,32], index: 1, kind: input, shape index: {}]
  %s2 = inlined_call_operand.vmem [shape: bf16[32,32], index: 2, kind: input, shape index: {}]
  %s3 = inlined_call_operand.vmem [shape: bf16[32,128], index: 3, kind: input, shape index: {}]
  %s4 = inlined_call_operand.vmem [shape: bf16[32,32], index: 4, kind: input, shape index: {}]
  %s5 = inlined_call_operand.vmem [shape: bf16[32,128], index: 5, kind: input, shape index: {}]
  %s6 = inlined_call_operand.vmem [shape: f32[3], index: 6, kind: input, shape index: {}]
  %s7 = inlined_call_operand.vmem [shape: f32[3], index: 7, kind: input, shape index: {}]
  %s8 = inlined_call_operand.hbm [shape: f32[3,32,128], index: 8, kind: output, shape index: {0}]
  %s9 = inlined_call_operand.hbm [shape: f32[32,128], index: 9, kind: output, shape index: {1}]
  %10 = xla_tuple %s8, %s9
  %s11 = sld [smem:[#allocation0]]
  $region58: #{image_cropper_forward.3} parent=0
    _
  %s13 = ssub.s32 1, %s11
  %s14 = scalar_select 0, %s13, %s11
  $region1: #{image_cropper_forward.3} parent=0
    #allocation2 [shape = 'u8[512]{0}', space=smem, size = 0x200, scoped, tag = 'input window, operand 6, single buffered']
    #allocation3 [shape = 's32[1]{0}', space=sflag, size = 0x4, scoped, tag = 'scoped memory for image_cropper_forward.3']
    #allocation4 [shape = 's32[1]{0}', space=sflag, size = 0x4, scoped, tag = 'scoped memory for image_cropper_forward.3']
    #allocation5 [shape = 'u8[512]{0}', space=smem, size = 0x200, scoped, tag = 'input window, operand 7, single buffered']
    #allocation6 [shape = 's32[1]{0}', space=sflag, size = 0x4, scoped, tag = 'scoped memory for image_cropper_forward.3']
    #allocation7 [shape = 'u8[49152]{0}', space=vmem, size = 0xc000, scoped, tag = 'output window, operand 0, single buffered']
    #allocation8 [shape = 'u8[16384]{0}', space=vmem, size = 0x4000, scoped, tag = 'output window, operand 1, single buffered']
    #allocation9 [shape = 's32[1]{0}', space=sflag, size = 0x4, scoped, tag = 'scoped memory for image_cropper_forward.3']
    %15 = vsyncpa [#allocation4], 0
    %16 = vsyncpa [#allocation6], 0
    %17 = vsyncpa [#allocation3], 0
    %18 = vsyncpa [#allocation9], 0
    // Predicated region
    $region2: #{image_cropper_forward.3} parent=1 // pred_check
      _
    $region3: #{image_cropper_forward.3} parent=1 // pred_check_branch
      %20 = sbr.rel (0) target = $region5
    $region4: #{image_cropper_forward.3} parent=1 // pred_region
      _
    $region5: #{image_cropper_forward.3} parent=1 // pred_fallthru
      _
    // Predicated region
    $region6: #{image_cropper_forward.3} parent=1 // pred_check
      _
    $region7: #{image_cropper_forward.3} parent=1 // pred_check_branch
      %22 = sbr.rel (0) target = $region9
    $region8: #{image_cropper_forward.3} parent=1 // pred_region
      _
    $region9: #{image_cropper_forward.3} parent=1 // pred_fallthru
      _
    // Predicated region
    $region10: #{image_cropper_forward.3} parent=1 // pred_check
      _
    $region11: #{image_cropper_forward.3} parent=1 // pred_check_branch
      %24 = sbr.rel (0) target = $region13
    $region12: #{image_cropper_forward.3} parent=1 // pred_region
      _
    $region13: #{image_cropper_forward.3} parent=1 // pred_fallthru
      _
    // Predicated region
    $region14: #{image_cropper_forward.3} parent=1 // pred_check
      _
    $region15: #{image_cropper_forward.3} parent=1 // pred_check_branch
      %26 = sbr.rel (0) target = $region17
    $region16: #{image_cropper_forward.3} parent=1 // pred_region
      _
    $region17: #{image_cropper_forward.3} parent=1 // pred_fallthru
      _
    // Predicated region
    $region18: #{image_cropper_forward.3} parent=1 // pred_check
      _
    $region19: #{image_cropper_forward.3} parent=1 // pred_check_branch
      %28 = sbr.rel (0) target = $region21
    $region20: #{image_cropper_forward.3} parent=1 // pred_region
      _
    $region21: #{image_cropper_forward.3} parent=1 // pred_fallthru
      _
    // Predicated region
    $region22: #{image_cropper_forward.3} parent=1 // pred_check
      _
    $region23: #{image_cropper_forward.3} parent=1 // pred_check_branch
      %30 = sbr.rel (0) target = $region25
    $region24: #{image_cropper_forward.3} parent=1 // pred_region
      _
    $region25: #{image_cropper_forward.3} parent=1 // pred_fallthru
      _
    // Predicated region
    $region26: #{image_cropper_forward.3} parent=1 // pred_check
      _
    $region27: #{image_cropper_forward.3} parent=1 // pred_check_branch
      %32 = sbr.rel (0) target = $region29
    $region28: #{image_cropper_forward.3} parent=1 // pred_region
      %s34 = ssub.s32 16, 16
      %35 = vsyncadd [#allocation4], %s34
      %s37 = sshll.u32 %s6, 4
      %s38 = int_to_ptr.vmem [resolvable:$true] %s37
      %40 = dma.vmem_to_smem %s38, 16, [#allocation2], [#allocation4]
    $region29: #{image_cropper_forward.3} parent=1 // pred_fallthru
      _
    // Predicated region
    $region30: #{image_cropper_forward.3} parent=1 // pred_check
      _
    $region31: #{image_cropper_forward.3} parent=1 // pred_check_branch
      %42 = sbr.rel (0) target = $region33
    $region32: #{image_cropper_forward.3} parent=1 // pred_region
      %s44 = ssub.s32 16, 16
      %45 = vsyncadd [#allocation6], %s44
      %s47 = sshll.u32 %s7, 4
      %s48 = int_to_ptr.vmem [resolvable:$true] %s47
      %50 = dma.vmem_to_smem %s48, 16, [#allocation5], [#allocation6]
    $region33: #{image_cropper_forward.3} parent=1 // pred_fallthru
      _
    // Predicated region
    $region34: #{image_cropper_forward.3} parent=1 // pred_check
      _
    $region35: #{image_cropper_forward.3} parent=1 // pred_check_branch
      %52 = sbr.rel (0) target = $region37
    $region36: #{image_cropper_forward.3} parent=1 // pred_region
      %53 = dma.done [#allocation4], 16
    $region37: #{image_cropper_forward.3} parent=1 // pred_fallthru
      _
    // Predicated region
    $region38: #{image_cropper_forward.3} parent=1 // pred_check
      _
    $region39: #{image_cropper_forward.3} parent=1 // pred_check_branch
      %55 = sbr.rel (0) target = $region41
    $region40: #{image_cropper_forward.3} parent=1 // pred_region
      %56 = dma.done [#allocation6], 16
    $region41: #{image_cropper_forward.3} parent=1 // pred_fallthru
      _
    %57 = sfence
    %v59 = vld [vmem:[%s2] sm:$0xf]
    %v60 = vld [vmem:[%s2 + $0x4] sm:$0xf]
    %v61 = vld [vmem:[%s2 + $0x8] sm:$0xf]
    %v62 = vld [vmem:[%s2 + $0xc] sm:$0xf]
    %v63 = vld [vmem:[%s3] sm:$0xf]
    %v64 = vld [vmem:[%s3 + $0x4] sm:$0xf]
    %v65 = vld [vmem:[%s3 + $0x8] sm:$0xf]
    %v66 = vld [vmem:[%s3 + $0xc] sm:$0xf]
    %v67 = vld [vmem:[%s1] sm:$0xff]
    %v68 = vunpack.c.l.u8.bf16 %v67
    %v69 = vunpack.c.h.u8.bf16 %v67
    %v70 = vld [vmem:[%s0] sm:$0xff]
    %v71 = vunpack.c.l.u8.bf16 %v70
    %v72 = vunpack.c.h.u8.bf16 %v70
    %v77 = vunpack.c.l.b16 %v63
    %v78 = vunpack.c.l.b16 %v64
    %v79 = vunpack.c.l.b16 %v65
    %v80 = vunpack.c.l.b16 %v66
    %v81 = vpack.c.b16 %v78, %v77
    %v82 = vpack.c.b16 %v80, %v79
    %vm85 = vcmask 261120
    %v87 = vsel %vm85, %v71, 0
    %v90 = vsel %vm85, %v72, 0
    %92 = vmatprep.subr.bf16.mxu0 0
    %93 = vmatpush1.bf16.msra.mxu0 %v81
    %94 = vmatprep.subr.bf16.mxu0 0
    %95 = vmatpush1.bf16.msra.mxu0 %v82
    %96 = vmatprep.subr.bf16.mxu0 0
    %97 = vmatpush1.bf16.msra.mxu0 0
    %98 = vmatprep.subr.bf16.mxu0 0
    %99 = vmatpush1.bf16.msra.mxu0 0
    %100 = vmatprep.subr.bf16.mxu0 0
    %101 = vmatpush1.bf16.msra.mxu0 0
    %102 = vmatprep.subr.bf16.mxu0 0
    %103 = vmatpush1.bf16.msra.mxu0 0
    %104 = vmatprep.subr.bf16.mxu0 0
    %105 = vmatpush1.bf16.msra.mxu0 0
    %106 = vmatprep.subr.bf16.mxu0 0
    %107 = vmatpush1.bf16.msra.mxu0 0
    %108 = vmatprep.subr.bf16.mxu0 0
    %109 = vmatpush1.bf16.msra.mxu0 0
    %110 = vmatprep.subr.bf16.mxu0 0
    %111 = vmatpush1.bf16.msra.mxu0 0
    %112 = vmatprep.subr.bf16.mxu0 0
    %113 = vmatpush1.bf16.msra.mxu0 0
    %114 = vmatprep.subr.bf16.mxu0 0
    %115 = vmatpush1.bf16.msra.mxu0 0
    %116 = vmatprep.subr.bf16.mxu0 0
    %117 = vmatpush1.bf16.msra.mxu0 0
    %118 = vmatprep.subr.bf16.mxu0 0
    %119 = vmatpush1.bf16.msra.mxu0 0
    %120 = vmatprep.subr.bf16.mxu0 0
    %121 = vmatpush1.bf16.msra.mxu0 0
    %122 = vmatprep.subr.bf16.mxu0 0
    %123 = vmatpush1.bf16.msra.mxu0 0
    %124 = vmatprep.mubr.bf16.mxu0 0
    %125 = vmatmul.mubr.bf16.gmra.mrb[0].mxu0 %v87
    %v126 = vpop.f32.mrb[0].mxu0
    %v127 = vadd.f32 0.0, %v126
    %v128 = vpop.f32.mrb[0].mxu0
    %v129 = vpop.f32.mrb[0].mxu0
    %v130 = vadd.f32 0.0, %v129
    %v131 = vpop.f32.mrb[0].mxu0
    %132 = vmatprep.mubr.bf16.mxu0 0
    %133 = vmatmul.mubr.bf16.gmra.mrb[0].mxu0 %v90
    %v134 = vpop.f32.mrb[0].mxu0
    %v135 = vadd.f32 0.0, %v134
    %v136 = vpop.f32.mrb[0].mxu0
    %v137 = vpop.f32.mrb[0].mxu0
    %v138 = vadd.f32 0.0, %v137
    %v139 = vpop.f32.mrb[0].mxu0
    %140 = vdwg.mxu0
    %v141 = vpack.c.bf16 %v130, %v127
    %v142 = vpack.c.bf16 %v138, %v135
    %v147 = vunpack.c.l.b16 %v59
    %v148 = vunpack.c.l.b16 %v60
    %v149 = vunpack.c.l.b16 %v61
    %v150 = vunpack.c.l.b16 %v62
    %v151 = vpack.c.b16 %v148, %v147
    %v152 = vpack.c.b16 %v150, %v149
    %v154 = vsel %vm85, %v151, 0
    %v157 = vsel %vm85, %v152, 0
    %159 = vmatprep.subr.bf16.mxu0 0
    %160 = vmatpush1.bf16.msra.mxu0 %v141
    %161 = vmatprep.subr.bf16.mxu0 0
    %162 = vmatpush1.bf16.msra.mxu0 %v142
    %163 = vmatprep.subr.bf16.mxu0 0
    %164 = vmatpush1.bf16.msra.mxu0 0
    %165 = vmatprep.subr.bf16.mxu0 0
    %166 = vmatpush1.bf16.msra.mxu0 0
    %167 = vmatprep.subr.bf16.mxu0 0
    %168 = vmatpush1.bf16.msra.mxu0 0
    %169 = vmatprep.subr.bf16.mxu0 0
    %170 = vmatpush1.bf16.msra.mxu0 0
    %171 = vmatprep.subr.bf16.mxu0 0
    %172 = vmatpush1.bf16.msra.mxu0 0
    %173 = vmatprep.subr.bf16.mxu0 0
    %174 = vmatpush1.bf16.msra.mxu0 0
    %175 = vmatprep.subr.bf16.mxu0 0
    %176 = vmatpush1.bf16.msra.mxu0 0
    %177 = vmatprep.subr.bf16.mxu0 0
    %178 = vmatpush1.bf16.msra.mxu0 0
    %179 = vmatprep.subr.bf16.mxu0 0
    %180 = vmatpush1.bf16.msra.mxu0 0
    %181 = vmatprep.subr.bf16.mxu0 0
    %182 = vmatpush1.bf16.msra.mxu0 0
    %183 = vmatprep.subr.bf16.mxu0 0
    %184 = vmatpush1.bf16.msra.mxu0 0
    %185 = vmatprep.subr.bf16.mxu0 0
    %186 = vmatpush1.bf16.msra.mxu0 0
    %187 = vmatprep.subr.bf16.mxu0 0
    %188 = vmatpush1.bf16.msra.mxu0 0
    %189 = vmatprep.subr.bf16.mxu0 0
    %190 = vmatpush1.bf16.msra.mxu0 0
    %191 = vmatprep.mubr.bf16.mxu0 0
    %192 = vmatmul.mubr.bf16.gmra.mrb[0].mxu0 %v154
    %v193 = vpop.f32.mrb[0].mxu0
    %v194 = vadd.f32 0.0, %v193
    %v195 = vpop.f32.mrb[0].mxu0
    %v196 = vpop.f32.mrb[0].mxu0
    %v197 = vadd.f32 0.0, %v196
    %v198 = vpop.f32.mrb[0].mxu0
    %199 = vmatprep.mubr.bf16.mxu0 0
    %200 = vmatmul.mubr.bf16.gmra.mrb[0].mxu0 %v157
    %v201 = vpop.f32.mrb[0].mxu0
    %v202 = vadd.f32 0.0, %v201
    %v203 = vpop.f32.mrb[0].mxu0
    %v204 = vpop.f32.mrb[0].mxu0
    %v205 = vadd.f32 0.0, %v204
    %v206 = vpop.f32.mrb[0].mxu0
    %207 = vdwg.mxu0
    %s208 = sld [smem:[#allocation2]]
    %v209 = vstv %s208
    %v210 = vmul.f32 %v194, %v209
    %v211 = vmul.f32 %v197, %v209
    %v212 = vmul.f32 %v202, %v209
    %v213 = vmul.f32 %v205, %v209
    %s214 = sld [smem:[#allocation5]]
    %v215 = vstv %s214
    %v216 = vsub.f32 %v210, %v215
    %v217 = vsub.f32 %v211, %v215
    %v218 = vsub.f32 %v212, %v215
    %v219 = vsub.f32 %v213, %v215
    %220 = vst [vmem:[#allocation7] sm:$0xff] %v216
    %221 = vst [vmem:[#allocation7 + $0x8] sm:$0xff] %v217
    %222 = vst [vmem:[#allocation7 + $0x10] sm:$0xff] %v218
    %223 = vst [vmem:[#allocation7 + $0x18] sm:$0xff] %v219
    %s224 = scalar_lea.vmem %s0, 8
    %v225 = vld [vmem:[%s224] sm:$0xff]
    %v226 = vunpack.c.l.u8.bf16 %v225
    %v227 = vunpack.c.h.u8.bf16 %v225
    %v229 = vsel %vm85, %v226, 0
    %v232 = vsel %vm85, %v227, 0
    %234 = vmatprep.subr.bf16.mxu0 0
    %235 = vmatpush1.bf16.msra.mxu0 %v81
    %236 = vmatprep.subr.bf16.mxu0 0
    %237 = vmatpush1.bf16.msra.mxu0 %v82
    %238 = vmatprep.subr.bf16.mxu0 0
    %239 = vmatpush1.bf16.msra.mxu0 0
    %240 = vmatprep.subr.bf16.mxu0 0
    %241 = vmatpush1.bf16.msra.mxu0 0
    %242 = vmatprep.subr.bf16.mxu0 0
    %243 = vmatpush1.bf16.msra.mxu0 0
    %244 = vmatprep.subr.bf16.mxu0 0
    %245 = vmatpush1.bf16.msra.mxu0 0
    %246 = vmatprep.subr.bf16.mxu0 0
    %247 = vmatpush1.bf16.msra.mxu0 0
    %248 = vmatprep.subr.bf16.mxu0 0
    %249 = vmatpush1.bf16.msra.mxu0 0
    %250 = vmatprep.subr.bf16.mxu0 0
    %251 = vmatpush1.bf16.msra.mxu0 0
    %252 = vmatprep.subr.bf16.mxu0 0
    %253 = vmatpush1.bf16.msra.mxu0 0
    %254 = vmatprep.subr.bf16.mxu0 0
    %255 = vmatpush1.bf16.msra.mxu0 0
    %256 = vmatprep.subr.bf16.mxu0 0
    %257 = vmatpush1.bf16.msra.mxu0 0
    %258 = vmatprep.subr.bf16.mxu0 0
    %259 = vmatpush1.bf16.msra.mxu0 0
    %260 = vmatprep.subr.bf16.mxu0 0
    %261 = vmatpush1.bf16.msra.mxu0 0
    %262 = vmatprep.subr.bf16.mxu0 0
    %263 = vmatpush1.bf16.msra.mxu0 0
    %264 = vmatprep.subr.bf16.mxu0 0
    %265 = vmatpush1.bf16.msra.mxu0 0
    %266 = vmatprep.mubr.bf16.mxu0 0
    %267 = vmatmul.mubr.bf16.gmra.mrb[0].mxu0 %v229
    %v268 = vpop.f32.mrb[0].mxu0
    %v269 = vadd.f32 0.0, %v268
    %v270 = vpop.f32.mrb[0].mxu0
    %v271 = vpop.f32.mrb[0].mxu0
    %v272 = vadd.f32 0.0, %v271
    %v273 = vpop.f32.mrb[0].mxu0
    %274 = vmatprep.mubr.bf16.mxu0 0
    %275 = vmatmul.mubr.bf16.gmra.mrb[0].mxu0 %v232
    %v276 = vpop.f32.mrb[0].mxu0
    %v277 = vadd.f32 0.0, %v276
    %v278 = vpop.f32.mrb[0].mxu0
    %v279 = vpop.f32.mrb[0].mxu0
    %v280 = vadd.f32 0.0, %v279
    %v281 = vpop.f32.mrb[0].mxu0
    %282 = vdwg.mxu0
    %v283 = vpack.c.bf16 %v272, %v269
    %v284 = vpack.c.bf16 %v280, %v277
    %285 = vmatprep.subr.bf16.mxu0 0
    %286 = vmatpush1.bf16.msra.mxu0 %v283
    %287 = vmatprep.subr.bf16.mxu0 0
    %288 = vmatpush1.bf16.msra.mxu0 %v284
    %289 = vmatprep.subr.bf16.mxu0 0
    %290 = vmatpush1.bf16.msra.mxu0 0
    %291 = vmatprep.subr.bf16.mxu0 0
    %292 = vmatpush1.bf16.msra.mxu0 0
    %293 = vmatprep.subr.bf16.mxu0 0
    %294 = vmatpush1.bf16.msra.mxu0 0
    %295 = vmatprep.subr.bf16.mxu0 0
    %296 = vmatpush1.bf16.msra.mxu0 0
    %297 = vmatprep.subr.bf16.mxu0 0
    %298 = vmatpush1.bf16.msra.mxu0 0
    %299 = vmatprep.subr.bf16.mxu0 0
    %300 = vmatpush1.bf16.msra.mxu0 0
    %301 = vmatprep.subr.bf16.mxu0 0
    %302 = vmatpush1.bf16.msra.mxu0 0
    %303 = vmatprep.subr.bf16.mxu0 0
    %304 = vmatpush1.bf16.msra.mxu0 0
    %305 = vmatprep.subr.bf16.mxu0 0
    %306 = vmatpush1.bf16.msra.mxu0 0
    %307 = vmatprep.subr.bf16.mxu0 0
    %308 = vmatpush1.bf16.msra.mxu0 0
    %309 = vmatprep.subr.bf16.mxu0 0
    %310 = vmatpush1.bf16.msra.mxu0 0
    %311 = vmatprep.subr.bf16.mxu0 0
    %312 = vmatpush1.bf16.msra.mxu0 0
    %313 = vmatprep.subr.bf16.mxu0 0
    %314 = vmatpush1.bf16.msra.mxu0 0
    %315 = vmatprep.subr.bf16.mxu0 0
    %316 = vmatpush1.bf16.msra.mxu0 0
    %317 = vmatprep.mubr.bf16.mxu0 0
    %318 = vmatmul.mubr.bf16.gmra.mrb[0].mxu0 %v154
    %v319 = vpop.f32.mrb[0].mxu0
    %v320 = vadd.f32 0.0, %v319
    %v321 = vpop.f32.mrb[0].mxu0
    %v322 = vpop.f32.mrb[0].mxu0
    %v323 = vadd.f32 0.0, %v322
    %v324 = vpop.f32.mrb[0].mxu0
    %325 = vmatprep.mubr.bf16.mxu0 0
    %326 = vmatmul.mubr.bf16.gmra.mrb[0].mxu0 %v157
    %v327 = vpop.f32.mrb[0].mxu0
    %v328 = vadd.f32 0.0, %v327
    %v329 = vpop.f32.mrb[0].mxu0
    %v330 = vpop.f32.mrb[0].mxu0
    %v331 = vadd.f32 0.0, %v330
    %v332 = vpop.f32.mrb[0].mxu0
    %333 = vdwg.mxu0
    %s334 = sld [smem:[#allocation2 + $0x1]]
    %v335 = vstv %s334
    %v336 = vmul.f32 %v320, %v335
    %v337 = vmul.f32 %v323, %v335
    %v338 = vmul.f32 %v328, %v335
    %v339 = vmul.f32 %v331, %v335
    %s340 = sld [smem:[#allocation5 + $0x1]]
    %v341 = vstv %s340
    %v342 = vsub.f32 %v336, %v341
    %v343 = vsub.f32 %v337, %v341
    %v344 = vsub.f32 %v338, %v341
    %v345 = vsub.f32 %v339, %v341
    %s346 = scalar_lea.vmem [#allocation7], 32
    %347 = vst [vmem:[%s346] sm:$0xff] %v342
    %348 = vst [vmem:[%s346 + $0x8] sm:$0xff] %v343
    %349 = vst [vmem:[%s346 + $0x10] sm:$0xff] %v344
    %350 = vst [vmem:[%s346 + $0x18] sm:$0xff] %v345
    %s351 = scalar_lea.vmem %s0, 16
    %v352 = vld [vmem:[%s351] sm:$0xff]
    %v353 = vunpack.c.l.u8.bf16 %v352
    %v354 = vunpack.c.h.u8.bf16 %v352
    %v356 = vsel %vm85, %v353, 0
    %v359 = vsel %vm85, %v354, 0
    %361 = vmatprep.subr.bf16.mxu0 0
    %362 = vmatpush1.bf16.msra.mxu0 %v81
    %363 = vmatprep.subr.bf16.mxu0 0
    %364 = vmatpush1.bf16.msra.mxu0 %v82
    %365 = vmatprep.subr.bf16.mxu0 0
    %366 = vmatpush1.bf16.msra.mxu0 0
    %367 = vmatprep.subr.bf16.mxu0 0
    %368 = vmatpush1.bf16.msra.mxu0 0
    %369 = vmatprep.subr.bf16.mxu0 0
    %370 = vmatpush1.bf16.msra.mxu0 0
    %371 = vmatprep.subr.bf16.mxu0 0
    %372 = vmatpush1.bf16.msra.mxu0 0
    %373 = vmatprep.subr.bf16.mxu0 0
    %374 = vmatpush1.bf16.msra.mxu0 0
    %375 = vmatprep.subr.bf16.mxu0 0
    %376 = vmatpush1.bf16.msra.mxu0 0
    %377 = vmatprep.subr.bf16.mxu0 0
    %378 = vmatpush1.bf16.msra.mxu0 0
    %379 = vmatprep.subr.bf16.mxu0 0
    %380 = vmatpush1.bf16.msra.mxu0 0
    %381 = vmatprep.subr.bf16.mxu0 0
    %382 = vmatpush1.bf16.msra.mxu0 0
    %383 = vmatprep.subr.bf16.mxu0 0
    %384 = vmatpush1.bf16.msra.mxu0 0
    %385 = vmatprep.subr.bf16.mxu0 0
    %386 = vmatpush1.bf16.msra.mxu0 0
    %387 = vmatprep.subr.bf16.mxu0 0
    %388 = vmatpush1.bf16.msra.mxu0 0
    %389 = vmatprep.subr.bf16.mxu0 0
    %390 = vmatpush1.bf16.msra.mxu0 0
    %391 = vmatprep.subr.bf16.mxu0 0
    %392 = vmatpush1.bf16.msra.mxu0 0
    %393 = vmatprep.mubr.bf16.mxu0 0
    %394 = vmatmul.mubr.bf16.gmra.mrb[0].mxu0 %v356
    %v395 = vpop.f32.mrb[0].mxu0
    %v396 = vadd.f32 0.0, %v395
    %v397 = vpop.f32.mrb[0].mxu0
    %v398 = vpop.f32.mrb[0].mxu0
    %v399 = vadd.f32 0.0, %v398
    %v400 = vpop.f32.mrb[0].mxu0
    %401 = vmatprep.mubr.bf16.mxu0 0
    %402 = vmatmul.mubr.bf16.gmra.mrb[0].mxu0 %v359
    %v403 = vpop.f32.mrb[0].mxu0
    %v404 = vadd.f32 0.0, %v403
    %v405 = vpop.f32.mrb[0].mxu0
    %v406 = vpop.f32.mrb[0].mxu0
    %v407 = vadd.f32 0.0, %v406
    %v408 = vpop.f32.mrb[0].mxu0
    %409 = vdwg.mxu0
    %v410 = vpack.c.bf16 %v399, %v396
    %v411 = vpack.c.bf16 %v407, %v404
    %412 = vmatprep.subr.bf16.mxu0 0
    %413 = vmatpush1.bf16.msra.mxu0 %v410
    %414 = vmatprep.subr.bf16.mxu0 0
    %415 = vmatpush1.bf16.msra.mxu0 %v411
    %416 = vmatprep.subr.bf16.mxu0 0
    %417 = vmatpush1.bf16.msra.mxu0 0
    %418 = vmatprep.subr.bf16.mxu0 0
    %419 = vmatpush1.bf16.msra.mxu0 0
    %420 = vmatprep.subr.bf16.mxu0 0
    %421 = vmatpush1.bf16.msra.mxu0 0
    %422 = vmatprep.subr.bf16.mxu0 0
    %423 = vmatpush1.bf16.msra.mxu0 0
    %424 = vmatprep.subr.bf16.mxu0 0
    %425 = vmatpush1.bf16.msra.mxu0 0
    %426 = vmatprep.subr.bf16.mxu0 0
    %427 = vmatpush1.bf16.msra.mxu0 0
    %428 = vmatprep.subr.bf16.mxu0 0
    %429 = vmatpush1.bf16.msra.mxu0 0
    %430 = vmatprep.subr.bf16.mxu0 0
    %431 = vmatpush1.bf16.msra.mxu0 0
    %432 = vmatprep.subr.bf16.mxu0 0
    %433 = vmatpush1.bf16.msra.mxu0 0
    %434 = vmatprep.subr.bf16.mxu0 0
    %435 = vmatpush1.bf16.msra.mxu0 0
    %436 = vmatprep.subr.bf16.mxu0 0
    %437 = vmatpush1.bf16.msra.mxu0 0
    %438 = vmatprep.subr.bf16.mxu0 0
    %439 = vmatpush1.bf16.msra.mxu0 0
    %440 = vmatprep.subr.bf16.mxu0 0
    %441 = vmatpush1.bf16.msra.mxu0 0
    %442 = vmatprep.subr.bf16.mxu0 0
    %443 = vmatpush1.bf16.msra.mxu0 0
    %444 = vmatprep.mubr.bf16.mxu0 0
    %445 = vmatmul.mubr.bf16.gmra.mrb[0].mxu0 %v154
    %v446 = vpop.f32.mrb[0].mxu0
    %v447 = vadd.f32 0.0, %v446
    %v448 = vpop.f32.mrb[0].mxu0
    %v449 = vpop.f32.mrb[0].mxu0
    %v450 = vadd.f32 0.0, %v449
    %v451 = vpop.f32.mrb[0].mxu0
    %452 = vmatprep.mubr.bf16.mxu0 0
    %453 = vmatmul.mubr.bf16.gmra.mrb[0].mxu0 %v157
    %v454 = vpop.f32.mrb[0].mxu0
    %v455 = vadd.f32 0.0, %v454
    %v456 = vpop.f32.mrb[0].mxu0
    %v457 = vpop.f32.mrb[0].mxu0
    %v458 = vadd.f32 0.0, %v457
    %v459 = vpop.f32.mrb[0].mxu0
    %460 = vdwg.mxu0
    %s461 = sld [smem:[#allocation2 + $0x2]]
    %v462 = vstv %s461
    %v463 = vmul.f32 %v447, %v462
    %v464 = vmul.f32 %v450, %v462
    %v465 = vmul.f32 %v455, %v462
    %v466 = vmul.f32 %v458, %v462
    %s467 = sld [smem:[#allocation5 + $0x2]]
    %v468 = vstv %s467
    %v469 = vsub.f32 %v463, %v468
    %v470 = vsub.f32 %v464, %v468
    %v471 = vsub.f32 %v465, %v468
    %v472 = vsub.f32 %v466, %v468
    %s473 = scalar_lea.vmem [#allocation7], 64
    %474 = vst [vmem:[%s473] sm:$0xff] %v469
    %475 = vst [vmem:[%s473 + $0x8] sm:$0xff] %v470
    %476 = vst [vmem:[%s473 + $0x10] sm:$0xff] %v471
    %477 = vst [vmem:[%s473 + $0x18] sm:$0xff] %v472
    %v478 = vld [vmem:[%s5] sm:$0xf]
    %v479 = vld [vmem:[%s5 + $0x4] sm:$0xf]
    %v480 = vld [vmem:[%s5 + $0x8] sm:$0xf]
    %v481 = vld [vmem:[%s5 + $0xc] sm:$0xf]
    %v486 = vunpack.c.l.b16 %v478
    %v487 = vunpack.c.l.b16 %v479
    %v488 = vunpack.c.l.b16 %v480
    %v489 = vunpack.c.l.b16 %v481
    %v490 = vpack.c.b16 %v487, %v486
    %v491 = vpack.c.b16 %v489, %v488
    %v495 = vsel %vm85, %v68, 0
    %v498 = vsel %vm85, %v69, 0
    %500 = vmatprep.subr.bf16.mxu0 0
    %501 = vmatpush1.bf16.msra.mxu0 %v490
    %502 = vmatprep.subr.bf16.mxu0 0
    %503 = vmatpush1.bf16.msra.mxu0 %v491
    %504 = vmatprep.subr.bf16.mxu0 0
    %505 = vmatpush1.bf16.msra.mxu0 0
    %506 = vmatprep.subr.bf16.mxu0 0
    %507 = vmatpush1.bf16.msra.mxu0 0
    %508 = vmatprep.subr.bf16.mxu0 0
    %509 = vmatpush1.bf16.msra.mxu0 0
    %510 = vmatprep.subr.bf16.mxu0 0
    %511 = vmatpush1.bf16.msra.mxu0 0
    %512 = vmatprep.subr.bf16.mxu0 0
    %513 = vmatpush1.bf16.msra.mxu0 0
    %514 = vmatprep.subr.bf16.mxu0 0
    %515 = vmatpush1.bf16.msra.mxu0 0
    %516 = vmatprep.subr.bf16.mxu0 0
    %517 = vmatpush1.bf16.msra.mxu0 0
    %518 = vmatprep.subr.bf16.mxu0 0
    %519 = vmatpush1.bf16.msra.mxu0 0
    %520 = vmatprep.subr.bf16.mxu0 0
    %521 = vmatpush1.bf16.msra.mxu0 0
    %522 = vmatprep.subr.bf16.mxu0 0
    %523 = vmatpush1.bf16.msra.mxu0 0
    %524 = vmatprep.subr.bf16.mxu0 0
    %525 = vmatpush1.bf16.msra.mxu0 0
    %526 = vmatprep.subr.bf16.mxu0 0
    %527 = vmatpush1.bf16.msra.mxu0 0
    %528 = vmatprep.subr.bf16.mxu0 0
    %529 = vmatpush1.bf16.msra.mxu0 0
    %530 = vmatprep.subr.bf16.mxu0 0
    %531 = vmatpush1.bf16.msra.mxu0 0
    %532 = vmatprep.mubr.bf16.mxu0 0
    %533 = vmatmul.mubr.bf16.gmra.mrb[0].mxu0 %v495
    %v534 = vpop.f32.mrb[0].mxu0
    %v535 = vadd.f32 0.0, %v534
    %v536 = vpop.f32.mrb[0].mxu0
    %v537 = vpop.f32.mrb[0].mxu0
    %v538 = vadd.f32 0.0, %v537
    %v539 = vpop.f32.mrb[0].mxu0
    %540 = vmatprep.mubr.bf16.mxu0 0
    %541 = vmatmul.mubr.bf16.gmra.mrb[0].mxu0 %v498
    %v542 = vpop.f32.mrb[0].mxu0
    %v543 = vadd.f32 0.0, %v542
    %v544 = vpop.f32.mrb[0].mxu0
    %v545 = vpop.f32.mrb[0].mxu0
    %v546 = vadd.f32 0.0, %v545
    %v547 = vpop.f32.mrb[0].mxu0
    %548 = vdwg.mxu0
    %v549 = vld [vmem:[%s4] sm:$0xf]
    %v550 = vld [vmem:[%s4 + $0x4] sm:$0xf]
    %v551 = vld [vmem:[%s4 + $0x8] sm:$0xf]
    %v552 = vld [vmem:[%s4 + $0xc] sm:$0xf]
    %v553 = vpack.c.bf16 %v538, %v535
    %v554 = vpack.c.bf16 %v546, %v543
    %v559 = vunpack.c.l.b16 %v549
    %v560 = vunpack.c.l.b16 %v550
    %v561 = vunpack.c.l.b16 %v551
    %v562 = vunpack.c.l.b16 %v552
    %v563 = vpack.c.b16 %v560, %v559
    %v564 = vpack.c.b16 %v562, %v561
    %v566 = vsel %vm85, %v563, 0
    %v569 = vsel %vm85, %v564, 0
    %571 = vmatprep.subr.bf16.mxu0 0
    %572 = vmatpush1.bf16.msra.mxu0 %v553
    %573 = vmatprep.subr.bf16.mxu0 0
    %574 = vmatpush1.bf16.msra.mxu0 %v554
    %575 = vmatprep.subr.bf16.mxu0 0
    %576 = vmatpush1.bf16.msra.mxu0 0
    %577 = vmatprep.subr.bf16.mxu0 0
    %578 = vmatpush1.bf16.msra.mxu0 0
    %579 = vmatprep.subr.bf16.mxu0 0
    %580 = vmatpush1.bf16.msra.mxu0 0
    %581 = vmatprep.subr.bf16.mxu0 0
    %582 = vmatpush1.bf16.msra.mxu0 0
    %583 = vmatprep.subr.bf16.mxu0 0
    %584 = vmatpush1.bf16.msra.mxu0 0
    %585 = vmatprep.subr.bf16.mxu0 0
    %586 = vmatpush1.bf16.msra.mxu0 0
    %587 = vmatprep.subr.bf16.mxu0 0
    %588 = vmatpush1.bf16.msra.mxu0 0
    %589 = vmatprep.subr.bf16.mxu0 0
    %590 = vmatpush1.bf16.msra.mxu0 0
    %591 = vmatprep.subr.bf16.mxu0 0
    %592 = vmatpush1.bf16.msra.mxu0 0
    %593 = vmatprep.subr.bf16.mxu0 0
    %594 = vmatpush1.bf16.msra.mxu0 0
    %595 = vmatprep.subr.bf16.mxu0 0
    %596 = vmatpush1.bf16.msra.mxu0 0
    %597 = vmatprep.subr.bf16.mxu0 0
    %598 = vmatpush1.bf16.msra.mxu0 0
    %599 = vmatprep.subr.bf16.mxu0 0
    %600 = vmatpush1.bf16.msra.mxu0 0
    %601 = vmatprep.subr.bf16.mxu0 0
    %602 = vmatpush1.bf16.msra.mxu0 0
    %603 = vmatprep.mubr.bf16.mxu0 0
    %604 = vmatmul.mubr.bf16.gmra.mrb[0].mxu0 %v566
    %v605 = vpop.f32.mrb[0].mxu0
    %v606 = vadd.f32 0.0, %v605
    %v607 = vpop.f32.mrb[0].mxu0
    %v608 = vpop.f32.mrb[0].mxu0
    %v609 = vadd.f32 0.0, %v608
    %v610 = vpop.f32.mrb[0].mxu0
    %611 = vmatprep.mubr.bf16.mxu0 0
    %612 = vmatmul.mubr.bf16.gmra.mrb[0].mxu0 %v569
    %v613 = vpop.f32.mrb[0].mxu0
    %v614 = vadd.f32 0.0, %v613
    %v615 = vpop.f32.mrb[0].mxu0
    %v616 = vpop.f32.mrb[0].mxu0
    %v617 = vadd.f32 0.0, %v616
    %v618 = vpop.f32.mrb[0].mxu0
    %619 = vdwg.mxu0
    %620 = vst [vmem:[#allocation8] sm:$0xff] %v606
    %621 = vst [vmem:[#allocation8 + $0x8] sm:$0xff] %v609
    %622 = vst [vmem:[#allocation8 + $0x10] sm:$0xff] %v614
    %623 = vst [vmem:[#allocation8 + $0x18] sm:$0xff] %v617
    // Predicated region
    $region42: #{image_cropper_forward.3} parent=1 // pred_check
      _
    $region43: #{image_cropper_forward.3} parent=1 // pred_check_branch
      %625 = sbr.rel (0) target = $region45
    $region44: #{image_cropper_forward.3} parent=1 // pred_region
      %s627 = ssub.s32 1536, 1536
      %628 = vsyncadd [#allocation3], %s627
      %s629 = sshll.u32 [#allocation7], 4
      %s630 = int_to_ptr.vmem [resolvable:$true] %s629
      %635 = dma.vmem_to_hbm [thread:$0]  %s630, 1536, %s8, [#allocation3], 128, 128, 8
    $region45: #{image_cropper_forward.3} parent=1 // pred_fallthru
      _
    // Predicated region
    $region46: #{image_cropper_forward.3} parent=1 // pred_check
      _
    $region47: #{image_cropper_forward.3} parent=1 // pred_check_branch
      %637 = sbr.rel (0) target = $region49
    $region48: #{image_cropper_forward.3} parent=1 // pred_region
      %s639 = ssub.s32 512, 512
      %640 = vsyncadd [#allocation9], %s639
      %s641 = sshll.u32 [#allocation8], 4
      %s642 = int_to_ptr.vmem [resolvable:$true] %s641
      %647 = dma.vmem_to_hbm [thread:$0]  %s642, 512, %s9, [#allocation9], 128, 128, 8
    $region49: #{image_cropper_forward.3} parent=1 // pred_fallthru
      _
    // Predicated region
    $region50: #{image_cropper_forward.3} parent=1 // pred_check
      _
    $region51: #{image_cropper_forward.3} parent=1 // pred_check_branch
      %649 = sbr.rel (0) target = $region53
    $region52: #{image_cropper_forward.3} parent=1 // pred_region
      %650 = dma.done [#allocation3], 1536
    $region53: #{image_cropper_forward.3} parent=1 // pred_fallthru
      _
    // Predicated region
    $region54: #{image_cropper_forward.3} parent=1 // pred_check
      _
    $region55: #{image_cropper_forward.3} parent=1 // pred_check_branch
      %652 = sbr.rel (0) target = $region57
    $region56: #{image_cropper_forward.3} parent=1 // pred_region
      %653 = dma.done [#allocation9], 512
    $region57: #{image_cropper_forward.3} parent=1 // pred_fallthru
      _
    %654 = vsyncpa [#allocation3], 1
    %655 = vsyncpa [#allocation9], 1
    %656 = vsyncpa [#allocation4], 1
    %657 = vsyncpa [#allocation6], 1

</llo_original>
